<compile_context>
chip_gen: v7x
topology: tpu7x:2x2x1
jax: 0.10.0
libtpu: 0.0.40
codegen_flags: <defaults>
</compile_context>

<pallas_src>
import math
import functools

import jax
import jax.numpy as jnp
from jax.experimental import pallas as pl
from jax.experimental.pallas import tpu as pltpu

MODEL_DIM = 512
FF_DIM = 2048
NUM_HEADS = 8
NUM_LAYERS = 6
LN_EPS = 1e-5


def _round_up(x, m):
    return (x + m - 1) // m * m


# ----------------------------------------------------------------------------
# Pallas kernels
# ----------------------------------------------------------------------------
def _linear_kernel(x_ref, w_ref, b_ref, o_ref, *, relu):
    x = x_ref[...].astype(jnp.bfloat16)              # bf16 operands, f32 accumulate
    acc = jnp.dot(x, w_ref[...], preferred_element_type=jnp.float32)
    acc = acc + b_ref[...]
    if relu:
        acc = jnp.maximum(acc, 0.0)
    o_ref[...] = acc


def pallas_linear(x, w, b, relu=False):
    """y = x @ w + b (optionally ReLU). x:(M,K) f32, w:(K,N) bf16, b:(N,) f32 -> (M,N) f32."""
    M, K = x.shape
    N = w.shape[1]
    TM = min(256, _round_up(M, 8))
    TN = min(512, _round_up(N, 128))
    Mp = _round_up(M, TM)
    Np = _round_up(N, TN)
    if Mp != M:
        x = jnp.pad(x, ((0, Mp - M), (0, 0)))
    if Np != N:
        w = jnp.pad(w, ((0, 0), (0, Np - N)))
        b = jnp.pad(b, ((0, Np - N),))
    out = pl.pallas_call(
        functools.partial(_linear_kernel, relu=relu),
        out_shape=jax.ShapeDtypeStruct((Mp, Np), jnp.float32),
        grid=(Mp // TM, Np // TN),
        in_specs=[
            pl.BlockSpec((TM, K), lambda i, j: (i, 0)),
            pl.BlockSpec((K, TN), lambda i, j: (0, j)),
            pl.BlockSpec((1, TN), lambda i, j: (0, j)),
        ],
        out_specs=pl.BlockSpec((TM, TN), lambda i, j: (i, j)),
        compiler_params=pltpu.CompilerParams(
            dimension_semantics=("parallel", "parallel")),
    )(x, w.astype(jnp.bfloat16), b.reshape(1, Np).astype(jnp.float32))
    if Mp != M or Np != N:
        out = out[:M, :N]
    return out


def _attn_core(q, k, v, mask, scale):
    # q,k,v: (H_tile, L, dh) bf16 ; mask: (Lq, Lk) f32 additive or None
    s = jnp.einsum('hqd,hkd->hqk', q, k, preferred_element_type=jnp.float32)
    s = s * scale
    if mask is not None:
        s = s + mask[None, :, :]
    s_max = jnp.max(s, axis=-1, keepdims=True)
    p = jnp.exp(s - s_max)
    denom = jnp.sum(p, axis=-1, keepdims=True)
    p = p * pl.reciprocal(denom, approx=True)        # EUP slot, ~free
    return jnp.einsum('hqk,hkd->hqd', p.astype(v.dtype), v,
                      preferred_element_type=jnp.float32)


def _attn_kernel_masked(q_ref, k_ref, v_ref, m_ref, o_ref, *, scale):
    o_ref[...] = _attn_core(q_ref[...], k_ref[...], v_ref[...], m_ref[...], scale)


def _attn_kernel_unmasked(q_ref, k_ref, v_ref, o_ref, *, scale):
    o_ref[...] = _attn_core(q_ref[...], k_ref[...], v_ref[...], None, scale)


def pallas_attention(q, k, v, mask=None):
    """q:(B*H,Lq,dh) k,v:(B*H,Lk,dh) bf16, mask:(Lq,Lk) additive f32 or None -> (B*H,Lq,dh) f32."""
    BH, Lq, dh = q.shape
    Lk = k.shape[1]
    HT = NUM_HEADS                                   # all heads of one batch per grid step
    scale = 1.0 / math.sqrt(dh)
    q_spec = pl.BlockSpec((HT, Lq, dh), lambda i: (i, 0, 0))
    kv_spec = pl.BlockSpec((HT, Lk, dh), lambda i: (i, 0, 0))
    in_specs = [q_spec, kv_spec, kv_spec]
    args = [q, k, v]
    if mask is not None:
        in_specs.append(pl.BlockSpec((Lq, Lk), lambda i: (0, 0)))
        args.append(mask)
        kern = functools.partial(_attn_kernel_masked, scale=scale)
    else:
        kern = functools.partial(_attn_kernel_unmasked, scale=scale)
    return pl.pallas_call(
        kern,
        out_shape=jax.ShapeDtypeStruct((BH, Lq, dh), jnp.float32),
        grid=(BH // HT,),
        in_specs=in_specs,
        out_specs=q_spec,
        compiler_params=pltpu.CompilerParams(dimension_semantics=("parallel",)),
    )(*args)


def _ln_body(h, g, b):
    mu = jnp.mean(h, axis=-1, keepdims=True)
    var = jnp.mean(jnp.square(h - mu), axis=-1, keepdims=True)
    return (h - mu) * jax.lax.rsqrt(var + LN_EPS) * g + b


def _ln_kernel(x_ref, g_ref, b_ref, o_ref):
    o_ref[...] = _ln_body(x_ref[...], g_ref[...], b_ref[...])


def _add_ln_kernel(x_ref, a_ref, g_ref, b_ref, o_ref):
    o_ref[...] = _ln_body(x_ref[...] + a_ref[...], g_ref[...], b_ref[...])


def pallas_layernorm(x, g, b, residual=None):
    """LayerNorm over last dim of x (or of x+residual). x:(M,D) f32, g,b:(D,)."""
    M, D = x.shape
    TM = min(512, _round_up(M, 8))
    Mp = _round_up(M, TM)
    padded = Mp != M
    if padded:
        x = jnp.pad(x, ((0, Mp - M), (0, 0)))
        if residual is not None:
            residual = jnp.pad(residual, ((0, Mp - M), (0, 0)))
    row_spec = pl.BlockSpec((TM, D), lambda i: (i, 0))
    vec_spec = pl.BlockSpec((1, D), lambda i: (0, 0))
    if residual is None:
        kern, in_specs, args = _ln_kernel, [row_spec, vec_spec, vec_spec], \
            (x, g.reshape(1, D), b.reshape(1, D))
    else:
        kern, in_specs, args = _add_ln_kernel, [row_spec, row_spec, vec_spec, vec_spec], \
            (x, residual, g.reshape(1, D), b.reshape(1, D))
    out = pl.pallas_call(
        kern,
        out_shape=jax.ShapeDtypeStruct((Mp, D), jnp.float32),
        grid=(Mp // TM,),
        in_specs=in_specs,
        out_specs=row_spec,
        compiler_params=pltpu.CompilerParams(dimension_semantics=("parallel",)),
    )(*args)
    return out[:M] if padded else out


# ----------------------------------------------------------------------------
# Model pieces (glue around the Pallas kernels)
# ----------------------------------------------------------------------------
def _split_heads(t, B, L, H, dh):
    return (t.reshape(B, L, H, dh).transpose(0, 2, 1, 3)
             .reshape(B * H, L, dh).astype(jnp.bfloat16))


def _merge_heads(o, B, L, H, dh):
    return o.reshape(B, H, L, dh).transpose(0, 2, 1, 3).reshape(B * L, H * dh)


def self_attention(x, p, mask):
    B, L, D = x.shape
    H, dh = NUM_HEADS, D // NUM_HEADS
    qkv = pallas_linear(x.reshape(B * L, D), p["wqkv"], p["bqkv"])     # fused Q|K|V
    q, k, v = qkv[:, :D], qkv[:, D:2 * D], qkv[:, 2 * D:]
    q = _split_heads(q, B, L, H, dh)
    k = _split_heads(k, B, L, H, dh)
    v = _split_heads(v, B, L, H, dh)
    o = pallas_attention(q, k, v, mask)
    o = _merge_heads(o, B, L, H, dh)
    return pallas_linear(o, p["wo"], p["bo"]).reshape(B, L, D)


def cross_attention(y, memory, p):
    B, Lq, D = y.shape
    Lk = memory.shape[1]
    H, dh = NUM_HEADS, D // NUM_HEADS
    q = pallas_linear(y.reshape(B * Lq, D), p["wq"], p["bq"])
    kv = pallas_linear(memory.reshape(B * Lk, D), p["wkv"], p["bkv"])  # fused K|V
    k, v = kv[:, :D], kv[:, D:]
    q = _split_heads(q, B, Lq, H, dh)
    k = _split_heads(k, B, Lk, H, dh)
    v = _split_heads(v, B, Lk, H, dh)
    o = pallas_attention(q, k, v, None)                # memory_mask=None -> unmasked kernel
    o = _merge_heads(o, B, Lq, H, dh)
    return pallas_linear(o, p["wo"], p["bo"]).reshape(B, Lq, D)


def add_ln_3d(x, a, g, b):
    B, L, D = x.shape
    return pallas_layernorm(x.reshape(B * L, D), g, b,
                            residual=a.reshape(B * L, D)).reshape(B, L, D)


def layernorm_3d(x, g, b):
    B, L, D = x.shape
    return pallas_layernorm(x.reshape(B * L, D), g, b).reshape(B, L, D)


def feed_forward(x, layer):
    B, L, D = x.shape
    h = pallas_linear(x.reshape(B * L, D), layer["ff1_w"], layer["ff1_b"], relu=True)
    h = pallas_linear(h, layer["ff2_w"], layer["ff2_b"])
    return h.reshape(B, L, D)


def encoder_layer(x, layer, src_mask):
    a = self_attention(x, layer["self_attn"], src_mask)
    x = add_ln_3d(x, a, layer["ln1_g"], layer["ln1_b"])          # fused residual + LN
    f = feed_forward(x, layer)
    x = add_ln_3d(x, f, layer["ln2_g"], layer["ln2_b"])
    return x


def decoder_layer(y, memory, layer, tgt_mask):
    a = self_attention(y, layer["self_attn"], tgt_mask)
    y = add_ln_3d(y, a, layer["ln1_g"], layer["ln1_b"])
    c = cross_attention(y, memory, layer["cross_attn"])
    y = add_ln_3d(y, c, layer["ln2_g"], layer["ln2_b"])
    f = feed_forward(y, layer)
    y = add_ln_3d(y, f, layer["ln3_g"], layer["ln3_b"])
    return y


def positional_encoding(max_len, d_model):
    pos = jnp.arange(max_len, dtype=jnp.float32)[:, None]
    div = jnp.exp(jnp.arange(0, d_model, 2, dtype=jnp.float32)
                  * (-math.log(10000.0) / d_model))
    pe = jnp.zeros((max_len, d_model), jnp.float32)
    pe = pe.at[:, 0::2].set(jnp.sin(pos * div))
    pe = pe.at[:, 1::2].set(jnp.cos(pos * div))
    return pe


def causal_mask(sz):
    r = jnp.arange(sz)
    return jnp.where(r[None, :] > r[:, None], -jnp.inf, 0.0).astype(jnp.float32)


def transformer_forward(params, src_ids, tgt_ids):
    B, Ls = src_ids.shape
    _, Lt = tgt_ids.shape
    D = MODEL_DIM

    src_mask = causal_mask(Ls)                 # PyTorch module passes causal src_mask
    tgt_mask = causal_mask(Lt)

    pe = positional_encoding(max(Ls, Lt), D)
    emb = params["embedding"]
    src = emb[src_ids] * math.sqrt(D) + pe[None, :Ls]      # dropout == identity
    tgt = emb[tgt_ids] * math.sqrt(D) + pe[None, :Lt]

    # ---- encoder ----
    x = src
    for layer in params["enc_layers"]:
        x = encoder_layer(x, layer, src_mask)
    memory = layernorm_3d(x, params["enc_norm_g"], params["enc_norm_b"])

    # ---- decoder ----
    y = tgt
    for layer in params["dec_layers"]:
        y = decoder_layer(y, memory, layer, tgt_mask)
    y = layernorm_3d(y, params["dec_norm_g"], params["dec_norm_b"])

    # ---- final projection ----
    V = params["fc_w"].shape[1]
    logits = pallas_linear(y.reshape(B * Lt, D), params["fc_w"], params["fc_b"])
    return logits.reshape(B, Lt, V)


# ----------------------------------------------------------------------------
# Deterministic parameter init (weights stored bf16 for MXU-native matmuls)
# ----------------------------------------------------------------------------
def init_params(key, vocab_size):
    D, F, L = MODEL_DIM, FF_DIM, NUM_LAYERS
    keys = iter(jax.random.split(key, 256))

    def w(shape, scale=0.02):
        return (jax.random.normal(next(keys), shape, jnp.float32) * scale).astype(jnp.bfloat16)

    def zeros(n):
        return jnp.zeros((n,), jnp.float32)

    def ones(n):
        return jnp.ones((n,), jnp.float32)

    def self_attn():
        return dict(wqkv=w((D, 3 * D)), bqkv=zeros(3 * D),
                    wo=w((D, D)), bo=zeros(D))

    def cross_attn():
        return dict(wq=w((D, D)), bq=zeros(D),
                    wkv=w((D, 2 * D)), bkv=zeros(2 * D),
                    wo=w((D, D)), bo=zeros(D))

    def enc_layer():
        return dict(self_attn=self_attn(),
                    ln1_g=ones(D), ln1_b=zeros(D),
                    ln2_g=ones(D), ln2_b=zeros(D),
                    ff1_w=w((D, F)), ff1_b=zeros(F),
                    ff2_w=w((F, D)), ff2_b=zeros(D))

    def dec_layer():
        return dict(self_attn=self_attn(), cross_attn=cross_attn(),
                    ln1_g=ones(D), ln1_b=zeros(D),
                    ln2_g=ones(D), ln2_b=zeros(D),
                    ln3_g=ones(D), ln3_b=zeros(D),
                    ff1_w=w((D, F)), ff1_b=zeros(F),
                    ff2_w=w((F, D)), ff2_b=zeros(D))

    embedding = jax.random.normal(next(keys), (vocab_size, D), jnp.float32) * 0.02
    return dict(
        embedding=embedding,
        enc_layers=[enc_layer() for _ in range(L)],
        dec_layers=[dec_layer() for _ in range(L)],
        enc_norm_g=ones(D), enc_norm_b=zeros(D),
        dec_norm_g=ones(D), dec_norm_b=zeros(D),
        fc_w=w((D, vocab_size)), fc_b=zeros(vocab_size),
    )


# ----------------------------------------------------------------------------
if __name__ == "__main__":
    VOCAB = 128
    B, LS, LT = 2, 8, 8

    root = jax.random.PRNGKey(0)
    pkey, skey, tkey = jax.random.split(root, 3)

    params = init_params(pkey, VOCAB)
    src_ids = jax.random.randint(skey, (B, LS), 0, VOCAB, dtype=jnp.int32)
    tgt_ids = jax.random.randint(tkey, (B, LT), 0, VOCAB, dtype=jnp.int32)

    logits = transformer_forward(params, src_ids, tgt_ids)
    logits = jax.block_until_ready(logits)

    assert logits.shape == (B, LT, VOCAB)
    assert logits.dtype == jnp.float32
    assert bool(jnp.all(jnp.isfinite(logits)))
    print("KERNEL_OK")
</pallas_src>

<mosaic_0001>
module attributes {stable_mosaic.version = 11 : i64} {
  func.func @_linear_kernel(%arg0: i32, %arg1: i32, %arg2: memref<16x512xf32, #tpu.memory_space<vmem>>, %arg3: memref<512x512xbf16, #tpu.memory_space<vmem>>, %arg4: memref<1x512xf32, #tpu.memory_space<vmem>>, %arg5: memref<16x512xf32, #tpu.memory_space<vmem>>) attributes {dimension_semantics = [#tpu.dimension_semantics<parallel>, #tpu.dimension_semantics<parallel>], iteration_bounds = array<i64: 1, 3>, scalar_prefetch = 0 : i64, scratch_operands = 0 : i64, tpu.core_type = #tpu.core_type<tc>, window_params = [{transform_indices = @transform_0, window_bounds = array<i64: 16, 512>}, {transform_indices = @transform_1, window_bounds = array<i64: 512, 512>}, {transform_indices = @transform_2, window_bounds = array<i64: 1, 512>}, {transform_indices = @transform_3, window_bounds = array<i64: 16, 512>}]} {
    %c0 = arith.constant 0 : index
    %c0_0 = arith.constant 0 : index
    %0 = vector.load %arg2[%c0, %c0_0] : memref<16x512xf32, #tpu.memory_space<vmem>>, vector<16x512xf32>
    %1 = arith.truncf %0 : vector<16x512xf32> to vector<16x512xbf16>
    %c0_1 = arith.constant 0 : index
    %c0_2 = arith.constant 0 : index
    %2 = vector.load %arg3[%c0_1, %c0_2] : memref<512x512xbf16, #tpu.memory_space<vmem>>, vector<512x512xbf16>
    %cst = arith.constant dense<0.000000e+00> : vector<16x512xf32>
    %3 = tpu.matmul %1, %2, %cst {dimension_numbers = #tpu.dot_dimension_numbers<[1], [0], [0], [1], [0, 0, 1, 1], [], []>} : vector<16x512xbf16>, vector<512x512xbf16>, vector<16x512xf32> -> vector<16x512xf32>
    %c0_3 = arith.constant 0 : index
    %c0_4 = arith.constant 0 : index
    %4 = vector.load %arg4[%c0_3, %c0_4] : memref<1x512xf32, #tpu.memory_space<vmem>>, vector<1x512xf32>
    %5 = vector.broadcast %4 : vector<1x512xf32> to vector<16x512xf32>
    %6 = arith.addf %3, %5 : vector<16x512xf32>
    %c0_5 = arith.constant 0 : index
    %c0_6 = arith.constant 0 : index
    %7 = vector.load %arg5[%c0_5, %c0_6] : memref<16x512xf32, #tpu.memory_space<vmem>>, vector<16x512xf32>
    tpu.vector_store %arg5[%c0_5, %c0_6], %6 {strides = array<i32>} : memref<16x512xf32, #tpu.memory_space<vmem>>, vector<16x512xf32>,
    return
  }
  func.func @transform_0(%arg0: i32, %arg1: i32) -> (i32, i32) {
    %c0_i32 = arith.constant 0 : i32
    %c0_i32_0 = arith.constant 0 : i32
    return %arg0, %c0_i32 : i32, i32
  }
  func.func @transform_1(%arg0: i32, %arg1: i32) -> (i32, i32) {
    %c0_i32 = arith.constant 0 : i32
    %c0_i32_0 = arith.constant 0 : i32
    return %c0_i32, %arg1 : i32, i32
  }
  func.func @transform_2(%arg0: i32, %arg1: i32) -> (i32, i32) {
    %c0_i32 = arith.constant 0 : i32
    %c0_i32_0 = arith.constant 0 : i32
    return %c0_i32, %arg1 : i32, i32
  }
  func.func @transform_3(%arg0: i32, %arg1: i32) -> (i32, i32) {
    %c0_i32 = arith.constant 0 : i32
    return %arg0, %arg1 : i32, i32
  }
}

</mosaic_0001>

<llo_original>
// kernel: tpu_custom_call.1
$region0: #{tpu_custom_call.1}
  #allocation0 [shape = 'u32[]', space=smem, size = 0x4, offset = 0x4, fixed_abs, tag = 'smem constant byte address 0x4 - core index']
  #allocation1 [shape = 'u32[144,128]{1,0:T(1,128)}', space=vmem, size = 0x12000, scoped, tag = 'internal scratch']
  %s0 = inlined_call_operand.hbm [shape: f32[16,512], index: 0, kind: input, shape index: {}]
  %s1 = inlined_call_operand.hbm [shape: bf16[512,1536], index: 1, kind: input, shape index: {}]
  %s2 = inlined_call_operand.hbm [shape: f32[1,1536], index: 2, kind: input, shape index: {}]
  %s3 = inlined_call_operand.hbm [shape: f32[16,1536], index: 3, kind: output, shape index: {}]
  %s4 = sld [smem:[#allocation0]]
  $region57: #{tpu_custom_call.1} parent=0
    _
  %s6 = ssub.s32 1, %s4
  %s7 = scalar_select 0, %s6, %s4
  $region1: #{tpu_custom_call.1} parent=0
    #allocation2 [shape = 'u8[32768]{0}', space=vmem, size = 0x8000, scoped, tag = 'input window, operand 0, single buffered']
    #allocation3 [shape = 's32[2]{0}', space=sflag, size = 0x8, scoped, tag = 'scoped memory for tpu_custom_call.1']
    #allocation4 [shape = 's32[2]{0}', space=sflag, size = 0x8, scoped, tag = 'scoped memory for tpu_custom_call.1']
    #allocation5 [shape = 'u8[1048576]{0}', space=vmem, size = 0x100000, scoped, tag = 'input window, operand 1']
    #allocation6 [shape = 's32[2]{0}', space=sflag, size = 0x8, scoped, tag = 'scoped memory for tpu_custom_call.1']
    #allocation7 [shape = 'u8[4096]{0}', space=vmem, size = 0x1000, scoped, tag = 'input window, operand 2']
    #allocation8 [shape = 'u8[65536]{0}', space=vmem, size = 0x10000, scoped, tag = 'output window, operand 0']
    %8 = vsyncpa [#allocation3], 0
    %9 = vsyncpa [#allocation6], 0
    %s10 = scalar_lea.sflag [#allocation6], 1
    %11 = vsyncpa %s10, 0
    %12 = vsyncpa [#allocation4], 0
    %s13 = scalar_lea.sflag [#allocation4], 1
    %14 = vsyncpa %s13, 0
    loop: start=0, step=1, limit=5
    $region2: #{tpu_custom_call.1} parent=1 // loop_pre_header
      _
    $region3: #{tpu_custom_call.1} parent=1 // loop_header
      %s16 = sphi 0, %s20
      %p17 = scmp.ge.s32.totalorder %s16, 5
      %s23 = sphi 0, %s35
      %s24 = sphi 0, %s31
      %s25 = sphi 0, %s23
      %s26 = sphi 0, %s24
      %s27 = sphi 0, %s25
      %s28 = sphi 0, %s26
      %s38 = sphi 0, %s40
      %s41 = sphi 0, %s38
      %s42 = sphi 0, %s41
      %s58 = sphi 0, %s42
      %s64 = sphi 0, %s66
      %s67 = sphi 0, %s64
      %s68 = sphi 0, %s67
      %s84 = sphi 0, %s68
      %s90 = sphi 0, %s92
      %s93 = sphi 0, %s90
      %s94 = sphi 0, %s93
      %s110 = sphi 0, %s94
      %s118 = sphi 0, %s120
      %s121 = sphi 0, %s118
      %s122 = sphi 0, %s121
      %s138 = sphi 0, %s122
    $region4: #{tpu_custom_call.1} parent=1 // loop_header_branch
      %19 = sbr.rel (%p17) target = $region8
    $region5: #{tpu_custom_call.1} parent=1 // loop_body
      %s21 = ssub.s32 %s16, 1
      %s22 = ssub.s32 %s16, 2
      %s29 = sadd.s32 1, %s24
      %p30 = scmp.ge.s32.totalorder %s29, 3
      %s31 = scalar_select %p30, 0, %s29
      %s32 = sadd.s32 1, %s23
      %s33 = scalar_select %p30, %s32, %s23
      %p34 = scmp.ge.s32.totalorder %s33, 1
      %s35 = scalar_select %p34, 0, %s33
      %s36 = ssub.s32 %s23, %s35
      %p37 = scmp.eq.s32.totalorder %s36, 0
      %s39 = sadd.s32 %s38, 1
      %s40 = scalar_select %p37, %s38, %s39
      %p43 = pneg %p37
      %p44 = scmp.eq.s32.totalorder %s16, 2
      %p45 = por %p43, %p44
      %p46 = scmp.ne.s32.totalorder %s38, %s41
      %p47 = scmp.eq.s32.totalorder %s16, 0
      %p48 = por %p46, %p47
      %p49 = scmp.ne.s32.totalorder %s38, %s41
      %p50 = scmp.eq.s32.totalorder %s21, 2
      %p51 = por %p49, %p50
      %p52 = scmp.ne.s32.totalorder %s41, %s42
      %p53 = scmp.eq.s32.totalorder %s21, 0
      %p54 = por %p52, %p53
      %p55 = scmp.ne.s32.totalorder %s41, %s42
      %p56 = scmp.eq.s32.totalorder %s22, 2
      %p57 = por %p55, %p56
      %p59 = scmp.ne.s32.totalorder %s42, %s58
      %p60 = scmp.eq.s32.totalorder %s22, 0
      %p61 = por %p59, %p60
      %s62 = ssub.s32 %s24, %s31
      %p63 = scmp.eq.s32.totalorder %s62, 0
      %s65 = sadd.s32 %s64, 1
      %s66 = scalar_select %p63, %s64, %s65
      %p69 = pneg %p63
      %p70 = scmp.eq.s32.totalorder %s16, 2
      %p71 = por %p69, %p70
      %p72 = scmp.ne.s32.totalorder %s64, %s67
      %p73 = scmp.eq.s32.totalorder %s16, 0
      %p74 = por %p72, %p73
      %p75 = scmp.ne.s32.totalorder %s64, %s67
      %p76 = scmp.eq.s32.totalorder %s21, 2
      %p77 = por %p75, %p76
      %p78 = scmp.ne.s32.totalorder %s67, %s68
      %p79 = scmp.eq.s32.totalorder %s21, 0
      %p80 = por %p78, %p79
      %p81 = scmp.ne.s32.totalorder %s67, %s68
      %p82 = scmp.eq.s32.totalorder %s22, 2
      %p83 = por %p81, %p82
      %p85 = scmp.ne.s32.totalorder %s68, %s84
      %p86 = scmp.eq.s32.totalorder %s22, 0
      %p87 = por %p85, %p86
      %s88 = ssub.s32 %s24, %s31
      %p89 = scmp.eq.s32.totalorder %s88, 0
      %s91 = sadd.s32 %s90, 1
      %s92 = scalar_select %p89, %s90, %s91
      %p95 = pneg %p89
      %p96 = scmp.eq.s32.totalorder %s16, 2
      %p97 = por %p95, %p96
      %p98 = scmp.ne.s32.totalorder %s90, %s93
      %p99 = scmp.eq.s32.totalorder %s16, 0
      %p100 = por %p98, %p99
      %p101 = scmp.ne.s32.totalorder %s90, %s93
      %p102 = scmp.eq.s32.totalorder %s21, 2
      %p103 = por %p101, %p102
      %p104 = scmp.ne.s32.totalorder %s93, %s94
      %p105 = scmp.eq.s32.totalorder %s21, 0
      %p106 = por %p104, %p105
      %p107 = scmp.ne.s32.totalorder %s93, %s94
      %p108 = scmp.eq.s32.totalorder %s22, 2
      %p109 = por %p107, %p108
      %p111 = scmp.ne.s32.totalorder %s94, %s110
      %p112 = scmp.eq.s32.totalorder %s22, 0
      %p113 = por %p111, %p112
      %s114 = ssub.s32 %s23, %s35
      %s115 = ssub.s32 %s24, %s31
      %s116 = sor.u32 %s114, %s115
      %p117 = scmp.eq.s32.totalorder %s116, 0
      %s119 = sadd.s32 %s118, 1
      %s120 = scalar_select %p117, %s118, %s119
      %p123 = pneg %p117
      %p124 = scmp.eq.s32.totalorder %s16, 2
      %p125 = por %p123, %p124
      %p126 = scmp.ne.s32.totalorder %s118, %s121
      %p127 = scmp.eq.s32.totalorder %s16, 0
      %p128 = por %p126, %p127
      %p129 = scmp.ne.s32.totalorder %s118, %s121
      %p130 = scmp.eq.s32.totalorder %s21, 2
      %p131 = por %p129, %p130
      %p132 = scmp.ne.s32.totalorder %s121, %s122
      %p133 = scmp.eq.s32.totalorder %s21, 0
      %p134 = por %p132, %p133
      %p135 = scmp.ne.s32.totalorder %s121, %s122
      %p136 = scmp.eq.s32.totalorder %s22, 2
      %p137 = por %p135, %p136
      %p139 = scmp.ne.s32.totalorder %s122, %s138
      %p140 = scmp.eq.s32.totalorder %s22, 0
      %p141 = por %p139, %p140
      %p142 = scmp.le.s32.totalorder 1, %s16
      %p143 = scmp.lt.s32.totalorder %s16, 4
      %p144 = pnand %p142, %p143
      %p145 = pneg %p144
      // Predicated region
      $region9: #{tpu_custom_call.1} parent=5 // pred_check
        _
      $region10: #{tpu_custom_call.1} parent=5 // pred_check_branch
        %147 = sbr.rel (%p144) target = $region12
      $region11: #{tpu_custom_call.1} parent=5 // pred_region
        %s148 = ssub.s32 %s16, 1
        // Predicated region
        $region13: #{tpu_custom_call.1} parent=11 // pred_check
          %p149 = pneg %p54
        $region14: #{tpu_custom_call.1} parent=11 // pred_check_branch
          %151 = sbr.rel (%p149) target = $region16
        $region15: #{tpu_custom_call.1} parent=11 // pred_region
          %s152 = smul.u32 2, %s25
          %s154 = ssub.s32 1024, 1024
          %155 = vsyncadd [#allocation3], %s154
          %s156 = smul.addr %s152, 4
          %s157 = smul.addr %s156, 128
          %s158 = scalar_lea.hbm %s0, %s157
          %s159 = sshll.u32 [#allocation2], 4
          %s160 = int_to_ptr.vmem [resolvable:$true] %s159
          %165 = dma.hbm_to_vmem [thread:$0]  %s158, 1024, %s160, [#allocation3], 512, 512, 32
        $region16: #{tpu_custom_call.1} parent=11 // pred_fallthru
          _
      $region12: #{tpu_custom_call.1} parent=5 // pred_fallthru
        _
      %p166 = scmp.lt.s32.totalorder %s16, 3
      // Predicated region
      $region17: #{tpu_custom_call.1} parent=5 // pred_check
        %p167 = pneg %p166
      $region18: #{tpu_custom_call.1} parent=5 // pred_check_branch
        %169 = sbr.rel (%p167) target = $region20
      $region19: #{tpu_custom_call.1} parent=5 // pred_region
        // Predicated region
        $region21: #{tpu_custom_call.1} parent=19 // pred_check
          %p170 = pneg %p74
        $region22: #{tpu_custom_call.1} parent=19 // pred_check_branch
          %172 = sbr.rel (%p170) target = $region24
        $region23: #{tpu_custom_call.1} parent=19 // pred_region
          %s173 = sand.u32 %s16, 1
          %s174 = scalar_lea.sflag [#allocation6], %s173
          %s175 = sand.u32 %s64, 1
          %s176 = smul.addr %s175, 1024
          %s177 = scalar_lea.vmem [#allocation5], %s176
          %s178 = smul.u32 4, %s24
          %s180 = ssub.s32 16384, 16384
          %181 = vsyncadd %s174, %s180
          %s182 = smul.addr %s178, 64
          %s183 = scalar_lea.hbm %s1, %s182
          %s184 = sshll.u32 %s177, 4
          %s185 = int_to_ptr.vmem [resolvable:$true] %s184
          %190 = dma.hbm_to_vmem [thread:$0]  %s183, 16384, %s185, %s174, 768, 256, 16
        $region24: #{tpu_custom_call.1} parent=19 // pred_fallthru
          _
        // Predicated region
        $region25: #{tpu_custom_call.1} parent=19 // pred_check
          %p191 = pneg %p100
        $region26: #{tpu_custom_call.1} parent=19 // pred_check_branch
          %193 = sbr.rel (%p191) target = $region28
        $region27: #{tpu_custom_call.1} parent=19 // pred_region
          %s194 = sand.u32 %s16, 1
          %s195 = scalar_lea.sflag [#allocation6], %s194
          %s196 = sand.u32 %s90, 1
          %s197 = smul.addr %s196, 4
          %s198 = scalar_lea.vmem [#allocation7], %s197
          %s199 = smul.u32 4, %s24
          %s201 = ssub.s32 64, 64
          %202 = vsyncadd %s195, %s201
          %s203 = smul.addr %s199, 16
          %s204 = scalar_lea.hbm %s2, %s203
          %s206 = sshll.u32 %s198, 4
          %s207 = int_to_ptr.vmem [resolvable:$true] %s206
          %209 = dma.hbm_to_vmem [thread:$0]  %s204, 64, %s207, %s195
        $region28: #{tpu_custom_call.1} parent=19 // pred_fallthru
          _
      $region20: #{tpu_custom_call.1} parent=5 // pred_fallthru
        _
      %p210 = scmp.le.s32.totalorder 1, %s16
      %p211 = scmp.lt.s32.totalorder %s16, 4
      %p212 = pnand %p210, %p211
      %p213 = pneg %p212
      // Predicated region
      $region29: #{tpu_custom_call.1} parent=5 // pred_check
        _
      $region30: #{tpu_custom_call.1} parent=5 // pred_check_branch
        %215 = sbr.rel (%p212) target = $region32
      $region31: #{tpu_custom_call.1} parent=5 // pred_region
        %s216 = ssub.s32 %s16, 1
        // Predicated region
        $region33: #{tpu_custom_call.1} parent=31 // pred_check
          %p217 = pneg %p54
        $region34: #{tpu_custom_call.1} parent=31 // pred_check_branch
          %219 = sbr.rel (%p217) target = $region36
        $region35: #{tpu_custom_call.1} parent=31 // pred_region
          %220 = dma.done [#allocation3], 1024
        $region36: #{tpu_custom_call.1} parent=31 // pred_fallthru
          _
        %s221 = sand.u32 %s21, 1
        %s222 = scalar_lea.sflag [#allocation6], %s221
        %s223 = sand.u32 %s67, 1
        %s224 = smul.addr %s223, 1024
        %s225 = scalar_lea.vmem [#allocation5], %s224
        // Predicated region
        $region37: #{tpu_custom_call.1} parent=31 // pred_check
          %p226 = pneg %p80
        $region38: #{tpu_custom_call.1} parent=31 // pred_check_branch
          %228 = sbr.rel (%p226) target = $region40
        $region39: #{tpu_custom_call.1} parent=31 // pred_region
          %229 = dma.done %s222, 16384
        $region40: #{tpu_custom_call.1} parent=31 // pred_fallthru
          _
        %s230 = sand.u32 %s21, 1
        %s231 = scalar_lea.sflag [#allocation6], %s230
        %s232 = sand.u32 %s93, 1
        %s233 = smul.addr %s232, 4
        %s234 = scalar_lea.vmem [#allocation7], %s233
        // Predicated region
        $region41: #{tpu_custom_call.1} parent=31 // pred_check
          %p235 = pneg %p106
        $region42: #{tpu_custom_call.1} parent=31 // pred_check_branch
          %237 = sbr.rel (%p235) target = $region44
        $region43: #{tpu_custom_call.1} parent=31 // pred_region
          %238 = dma.done %s231, 64
        $region44: #{tpu_custom_call.1} parent=31 // pred_fallthru
          _
        %p239 = pneg %p54
        %p240 = pneg %p51
        %s241 = sand.u32 %s21, 1
        %s242 = scalar_lea.sflag [#allocation6], %s241
        %s243 = sand.u32 %s67, 1
        %s244 = smul.addr %s243, 1024
        %s245 = scalar_lea.vmem [#allocation5], %s244
        %p246 = pneg %p80
        %p247 = pneg %p77
        %s248 = sand.u32 %s21, 1
        %s249 = scalar_lea.sflag [#allocation6], %s248
        %s250 = sand.u32 %s93, 1
        %s251 = smul.addr %s250, 4
        %s252 = scalar_lea.vmem [#allocation7], %s251
        %p253 = pneg %p106
        %p254 = pneg %p103
        %p255 = pneg %p134
        %p256 = pneg %p131
        %s257 = sand.u32 %s121, 1
        %s258 = scalar_lea.sflag [#allocation4], %s257
        %s259 = sand.u32 %s121, 1
        %s260 = smul.addr %s259, 64
        %s261 = scalar_lea.vmem [#allocation8], %s260
        %s262 = smul.u32 2, %s25
        %s263 = smul.u32 4, %s26
        %s264 = smul.u32 4, %s26
        %s265 = smul.u32 2, %s25
        %s266 = smul.u32 4, %s26
        %v267 = vld [vmem:[#allocation2] sm:$0xff]
        %v268 = vld [vmem:[#allocation2 + $0x8] sm:$0xff]
        %v269 = vld [vmem:[#allocation2 + $0x10] sm:$0xff]
        %v270 = vld [vmem:[#allocation2 + $0x18] sm:$0xff]
        %v271 = vld [vmem:[#allocation2 + $0x20] sm:$0xff]
        %v272 = vld [vmem:[#allocation2 + $0x28] sm:$0xff]
        %v273 = vld [vmem:[#allocation2 + $0x30] sm:$0xff]
        %v274 = vld [vmem:[#allocation2 + $0x38] sm:$0xff]
        %v275 = vpack.c.bf16 %v271, %v267
        %v276 = vpack.c.bf16 %v272, %v268
        %v277 = vpack.c.bf16 %v273, %v269
        %v278 = vpack.c.bf16 %v274, %v270
        %v279 = vld [vmem:[%s225] sm:$0xff]
        %v280 = vld [vmem:[%s225 + $0x8] sm:$0xff]
        %v281 = vld [vmem:[%s225 + $0x10] sm:$0xff]
        %v282 = vld [vmem:[%s225 + $0x18] sm:$0xff]
        %v283 = vld [vmem:[%s225 + $0x20] sm:$0xff]
        %v284 = vld [vmem:[%s225 + $0x28] sm:$0xff]
        %v285 = vld [vmem:[%s225 + $0x30] sm:$0xff]
        %v286 = vld [vmem:[%s225 + $0x38] sm:$0xff]
        %v287 = vld [vmem:[%s225 + $0x40] sm:$0xff]
        %v288 = vld [vmem:[%s225 + $0x48] sm:$0xff]
        %v289 = vld [vmem:[%s225 + $0x50] sm:$0xff]
        %v290 = vld [vmem:[%s225 + $0x58] sm:$0xff]
        %v291 = vld [vmem:[%s225 + $0x60] sm:$0xff]
        %v292 = vld [vmem:[%s225 + $0x68] sm:$0xff]
        %v293 = vld [vmem:[%s225 + $0x70] sm:$0xff]
        %v294 = vld [vmem:[%s225 + $0x78] sm:$0xff]
        %v295 = vld [vmem:[%s225 + $0x80] sm:$0xff]
        %v296 = vld [vmem:[%s225 + $0x88] sm:$0xff]
        %v297 = vld [vmem:[%s225 + $0x90] sm:$0xff]
        %v298 = vld [vmem:[%s225 + $0x98] sm:$0xff]
        %v299 = vld [vmem:[%s225 + $0xa0] sm:$0xff]
        %v300 = vld [vmem:[%s225 + $0xa8] sm:$0xff]
        %v301 = vld [vmem:[%s225 + $0xb0] sm:$0xff]
        %v302 = vld [vmem:[%s225 + $0xb8] sm:$0xff]
        %v303 = vld [vmem:[%s225 + $0xc0] sm:$0xff]
        %v304 = vld [vmem:[%s225 + $0xc8] sm:$0xff]
        %v305 = vld [vmem:[%s225 + $0xd0] sm:$0xff]
        %v306 = vld [vmem:[%s225 + $0xd8] sm:$0xff]
        %v307 = vld [vmem:[%s225 + $0xe0] sm:$0xff]
        %v308 = vld [vmem:[%s225 + $0xe8] sm:$0xff]
        %v309 = vld [vmem:[%s225 + $0xf0] sm:$0xff]
        %v310 = vld [vmem:[%s225 + $0xf8] sm:$0xff]
        %v311 = vld [vmem:[%s225 + $0x100] sm:$0xff]
        %v312 = vld [vmem:[%s225 + $0x108] sm:$0xff]
        %v313 = vld [vmem:[%s225 + $0x110] sm:$0xff]
        %v314 = vld [vmem:[%s225 + $0x118] sm:$0xff]
        %v315 = vld [vmem:[%s225 + $0x120] sm:$0xff]
        %v316 = vld [vmem:[%s225 + $0x128] sm:$0xff]
        %v317 = vld [vmem:[%s225 + $0x130] sm:$0xff]
        %v318 = vld [vmem:[%s225 + $0x138] sm:$0xff]
        %v319 = vld [vmem:[%s225 + $0x140] sm:$0xff]
        %v320 = vld [vmem:[%s225 + $0x148] sm:$0xff]
        %v321 = vld [vmem:[%s225 + $0x150] sm:$0xff]
        %v322 = vld [vmem:[%s225 + $0x158] sm:$0xff]
        %v323 = vld [vmem:[%s225 + $0x160] sm:$0xff]
        %v324 = vld [vmem:[%s225 + $0x168] sm:$0xff]
        %v325 = vld [vmem:[%s225 + $0x170] sm:$0xff]
        %v326 = vld [vmem:[%s225 + $0x178] sm:$0xff]
        %v327 = vld [vmem:[%s225 + $0x180] sm:$0xff]
        %v328 = vld [vmem:[%s225 + $0x188] sm:$0xff]
        %v329 = vld [vmem:[%s225 + $0x190] sm:$0xff]
        %v330 = vld [vmem:[%s225 + $0x198] sm:$0xff]
        %v331 = vld [vmem:[%s225 + $0x1a0] sm:$0xff]
        %v332 = vld [vmem:[%s225 + $0x1a8] sm:$0xff]
        %v333 = vld [vmem:[%s225 + $0x1b0] sm:$0xff]
        %v334 = vld [vmem:[%s225 + $0x1b8] sm:$0xff]
        %v335 = vld [vmem:[%s225 + $0x1c0] sm:$0xff]
        %v336 = vld [vmem:[%s225 + $0x1c8] sm:$0xff]
        %v337 = vld [vmem:[%s225 + $0x1d0] sm:$0xff]
        %v338 = vld [vmem:[%s225 + $0x1d8] sm:$0xff]
        %v339 = vld [vmem:[%s225 + $0x1e0] sm:$0xff]
        %v340 = vld [vmem:[%s225 + $0x1e8] sm:$0xff]
        %v341 = vld [vmem:[%s225 + $0x1f0] sm:$0xff]
        %v342 = vld [vmem:[%s225 + $0x1f8] sm:$0xff]
        %v343 = vld [vmem:[%s225 + $0x200] sm:$0xff]
        %v344 = vld [vmem:[%s225 + $0x208] sm:$0xff]
        %v345 = vld [vmem:[%s225 + $0x210] sm:$0xff]
        %v346 = vld [vmem:[%s225 + $0x218] sm:$0xff]
        %v347 = vld [vmem:[%s225 + $0x220] sm:$0xff]
        %v348 = vld [vmem:[%s225 + $0x228] sm:$0xff]
        %v349 = vld [vmem:[%s225 + $0x230] sm:$0xff]
        %v350 = vld [vmem:[%s225 + $0x238] sm:$0xff]
        %v351 = vld [vmem:[%s225 + $0x240] sm:$0xff]
        %v352 = vld [vmem:[%s225 + $0x248] sm:$0xff]
        %v353 = vld [vmem:[%s225 + $0x250] sm:$0xff]
        %v354 = vld [vmem:[%s225 + $0x258] sm:$0xff]
        %v355 = vld [vmem:[%s225 + $0x260] sm:$0xff]
        %v356 = vld [vmem:[%s225 + $0x268] sm:$0xff]
        %v357 = vld [vmem:[%s225 + $0x270] sm:$0xff]
        %v358 = vld [vmem:[%s225 + $0x278] sm:$0xff]
        %v359 = vld [vmem:[%s225 + $0x280] sm:$0xff]
        %v360 = vld [vmem:[%s225 + $0x288] sm:$0xff]
        %v361 = vld [vmem:[%s225 + $0x290] sm:$0xff]
        %v362 = vld [vmem:[%s225 + $0x298] sm:$0xff]
        %v363 = vld [vmem:[%s225 + $0x2a0] sm:$0xff]
        %v364 = vld [vmem:[%s225 + $0x2a8] sm:$0xff]
        %v365 = vld [vmem:[%s225 + $0x2b0] sm:$0xff]
        %v366 = vld [vmem:[%s225 + $0x2b8] sm:$0xff]
        %v367 = vld [vmem:[%s225 + $0x2c0] sm:$0xff]
        %v368 = vld [vmem:[%s225 + $0x2c8] sm:$0xff]
        %v369 = vld [vmem:[%s225 + $0x2d0] sm:$0xff]
        %v370 = vld [vmem:[%s225 + $0x2d8] sm:$0xff]
        %v371 = vld [vmem:[%s225 + $0x2e0] sm:$0xff]
        %v372 = vld [vmem:[%s225 + $0x2e8] sm:$0xff]
        %v373 = vld [vmem:[%s225 + $0x2f0] sm:$0xff]
        %v374 = vld [vmem:[%s225 + $0x2f8] sm:$0xff]
        %v375 = vld [vmem:[%s225 + $0x300] sm:$0xff]
        %v376 = vld [vmem:[%s225 + $0x308] sm:$0xff]
        %v377 = vld [vmem:[%s225 + $0x310] sm:$0xff]
        %v378 = vld [vmem:[%s225 + $0x318] sm:$0xff]
        %v379 = vld [vmem:[%s225 + $0x320] sm:$0xff]
        %v380 = vld [vmem:[%s225 + $0x328] sm:$0xff]
        %v381 = vld [vmem:[%s225 + $0x330] sm:$0xff]
        %v382 = vld [vmem:[%s225 + $0x338] sm:$0xff]
        %v383 = vld [vmem:[%s225 + $0x340] sm:$0xff]
        %v384 = vld [vmem:[%s225 + $0x348] sm:$0xff]
        %v385 = vld [vmem:[%s225 + $0x350] sm:$0xff]
        %v386 = vld [vmem:[%s225 + $0x358] sm:$0xff]
        %v387 = vld [vmem:[%s225 + $0x360] sm:$0xff]
        %v388 = vld [vmem:[%s225 + $0x368] sm:$0xff]
        %v389 = vld [vmem:[%s225 + $0x370] sm:$0xff]
        %v390 = vld [vmem:[%s225 + $0x378] sm:$0xff]
        %v391 = vld [vmem:[%s225 + $0x380] sm:$0xff]
        %v392 = vld [vmem:[%s225 + $0x388] sm:$0xff]
        %v393 = vld [vmem:[%s225 + $0x390] sm:$0xff]
        %v394 = vld [vmem:[%s225 + $0x398] sm:$0xff]
        %v395 = vld [vmem:[%s225 + $0x3a0] sm:$0xff]
        %v396 = vld [vmem:[%s225 + $0x3a8] sm:$0xff]
        %v397 = vld [vmem:[%s225 + $0x3b0] sm:$0xff]
        %v398 = vld [vmem:[%s225 + $0x3b8] sm:$0xff]
        %v399 = vld [vmem:[%s225 + $0x3c0] sm:$0xff]
        %v400 = vld [vmem:[%s225 + $0x3c8] sm:$0xff]
        %v401 = vld [vmem:[%s225 + $0x3d0] sm:$0xff]
        %v402 = vld [vmem:[%s225 + $0x3d8] sm:$0xff]
        %v403 = vld [vmem:[%s225 + $0x3e0] sm:$0xff]
        %v404 = vld [vmem:[%s225 + $0x3e8] sm:$0xff]
        %v405 = vld [vmem:[%s225 + $0x3f0] sm:$0xff]
        %v406 = vld [vmem:[%s225 + $0x3f8] sm:$0xff]
        %v407 = vld [vmem:[%s234] sm:$0xf]
        %v409 = vlaneseq
        %v410 = vshrl.u32 %v409, 7
        %v411 = vsub.s32 0, %v410
        %v412 = vrot.slane %v407, %v411
        %v413 = vlaneseq
        %v414 = vshrl.u32 %v413, 7
        %v415 = vsub.s32 1, %v414
        %v416 = vrot.slane %v407, %v415
        %v417 = vlaneseq
        %v418 = vshrl.u32 %v417, 7
        %v419 = vsub.s32 2, %v418
        %v420 = vrot.slane %v407, %v419
        %v421 = vlaneseq
        %v422 = vshrl.u32 %v421, 7
        %v423 = vsub.s32 3, %v422
        %v424 = vrot.slane %v407, %v423
        %v557 = vunpack.c.l.b16 %v279
        %v558 = vunpack.c.h.b16 %v279
        %v559 = vunpack.c.l.b16 %v280
        %v560 = vunpack.c.h.b16 %v280
        %v561 = vunpack.c.l.b16 %v281
        %v562 = vunpack.c.h.b16 %v281
        %v563 = vunpack.c.l.b16 %v282
        %v564 = vunpack.c.h.b16 %v282
        %v565 = vunpack.c.l.b16 %v283
        %v566 = vunpack.c.h.b16 %v283
        %v567 = vunpack.c.l.b16 %v284
        %v568 = vunpack.c.h.b16 %v284
        %v569 = vunpack.c.l.b16 %v285
        %v570 = vunpack.c.h.b16 %v285
        %v571 = vunpack.c.l.b16 %v286
        %v572 = vunpack.c.h.b16 %v286
        %v573 = vunpack.c.l.b16 %v287
        %v574 = vunpack.c.h.b16 %v287
        %v575 = vunpack.c.l.b16 %v288
        %v576 = vunpack.c.h.b16 %v288
        %v577 = vunpack.c.l.b16 %v289
        %v578 = vunpack.c.h.b16 %v289
        %v579 = vunpack.c.l.b16 %v290
        %v580 = vunpack.c.h.b16 %v290
        %v581 = vunpack.c.l.b16 %v291
        %v582 = vunpack.c.h.b16 %v291
        %v583 = vunpack.c.l.b16 %v292
        %v584 = vunpack.c.h.b16 %v292
        %v585 = vunpack.c.l.b16 %v293
        %v586 = vunpack.c.h.b16 %v293
        %v587 = vunpack.c.l.b16 %v294
        %v588 = vunpack.c.h.b16 %v294
        %v589 = vunpack.c.l.b16 %v295
        %v590 = vunpack.c.h.b16 %v295
        %v591 = vunpack.c.l.b16 %v296
        %v592 = vunpack.c.h.b16 %v296
        %v593 = vunpack.c.l.b16 %v297
        %v594 = vunpack.c.h.b16 %v297
        %v595 = vunpack.c.l.b16 %v298
        %v596 = vunpack.c.h.b16 %v298
        %v597 = vunpack.c.l.b16 %v299
        %v598 = vunpack.c.h.b16 %v299
        %v599 = vunpack.c.l.b16 %v300
        %v600 = vunpack.c.h.b16 %v300
        %v601 = vunpack.c.l.b16 %v301
        %v602 = vunpack.c.h.b16 %v301
        %v603 = vunpack.c.l.b16 %v302
        %v604 = vunpack.c.h.b16 %v302
        %v605 = vunpack.c.l.b16 %v303
        %v606 = vunpack.c.h.b16 %v303
        %v607 = vunpack.c.l.b16 %v304
        %v608 = vunpack.c.h.b16 %v304
        %v609 = vunpack.c.l.b16 %v305
        %v610 = vunpack.c.h.b16 %v305
        %v611 = vunpack.c.l.b16 %v306
        %v612 = vunpack.c.h.b16 %v306
        %v613 = vunpack.c.l.b16 %v307
        %v614 = vunpack.c.h.b16 %v307
        %v615 = vunpack.c.l.b16 %v308
        %v616 = vunpack.c.h.b16 %v308
        %v617 = vunpack.c.l.b16 %v309
        %v618 = vunpack.c.h.b16 %v309
        %v619 = vunpack.c.l.b16 %v310
        %v620 = vunpack.c.h.b16 %v310
        %v621 = vunpack.c.l.b16 %v311
        %v622 = vunpack.c.h.b16 %v311
        %v623 = vunpack.c.l.b16 %v312
        %v624 = vunpack.c.h.b16 %v312
        %v625 = vunpack.c.l.b16 %v313
        %v626 = vunpack.c.h.b16 %v313
        %v627 = vunpack.c.l.b16 %v314
        %v628 = vunpack.c.h.b16 %v314
        %v629 = vunpack.c.l.b16 %v315
        %v630 = vunpack.c.h.b16 %v315
        %v631 = vunpack.c.l.b16 %v316
        %v632 = vunpack.c.h.b16 %v316
        %v633 = vunpack.c.l.b16 %v317
        %v634 = vunpack.c.h.b16 %v317
        %v635 = vunpack.c.l.b16 %v318
        %v636 = vunpack.c.h.b16 %v318
        %v637 = vunpack.c.l.b16 %v319
        %v638 = vunpack.c.h.b16 %v319
        %v639 = vunpack.c.l.b16 %v320
        %v640 = vunpack.c.h.b16 %v320
        %v641 = vunpack.c.l.b16 %v321
        %v642 = vunpack.c.h.b16 %v321
        %v643 = vunpack.c.l.b16 %v322
        %v644 = vunpack.c.h.b16 %v322
        %v645 = vunpack.c.l.b16 %v323
        %v646 = vunpack.c.h.b16 %v323
        %v647 = vunpack.c.l.b16 %v324
        %v648 = vunpack.c.h.b16 %v324
        %v649 = vunpack.c.l.b16 %v325
        %v650 = vunpack.c.h.b16 %v325
        %v651 = vunpack.c.l.b16 %v326
        %v652 = vunpack.c.h.b16 %v326
        %v653 = vunpack.c.l.b16 %v327
        %v654 = vunpack.c.h.b16 %v327
        %v655 = vunpack.c.l.b16 %v328
        %v656 = vunpack.c.h.b16 %v328
        %v657 = vunpack.c.l.b16 %v329
        %v658 = vunpack.c.h.b16 %v329
        %v659 = vunpack.c.l.b16 %v330
        %v660 = vunpack.c.h.b16 %v330
        %v661 = vunpack.c.l.b16 %v331
        %v662 = vunpack.c.h.b16 %v331
        %v663 = vunpack.c.l.b16 %v332
        %v664 = vunpack.c.h.b16 %v332
        %v665 = vunpack.c.l.b16 %v333
        %v666 = vunpack.c.h.b16 %v333
        %v667 = vunpack.c.l.b16 %v334
        %v668 = vunpack.c.h.b16 %v334
        %v669 = vunpack.c.l.b16 %v335
        %v670 = vunpack.c.h.b16 %v335
        %v671 = vunpack.c.l.b16 %v336
        %v672 = vunpack.c.h.b16 %v336
        %v673 = vunpack.c.l.b16 %v337
        %v674 = vunpack.c.h.b16 %v337
        %v675 = vunpack.c.l.b16 %v338
        %v676 = vunpack.c.h.b16 %v338
        %v677 = vunpack.c.l.b16 %v339
        %v678 = vunpack.c.h.b16 %v339
        %v679 = vunpack.c.l.b16 %v340
        %v680 = vunpack.c.h.b16 %v340
        %v681 = vunpack.c.l.b16 %v341
        %v682 = vunpack.c.h.b16 %v341
        %v683 = vunpack.c.l.b16 %v342
        %v684 = vunpack.c.h.b16 %v342
        %v685 = vunpack.c.l.b16 %v343
        %v686 = vunpack.c.h.b16 %v343
        %v687 = vunpack.c.l.b16 %v344
        %v688 = vunpack.c.h.b16 %v344
        %v689 = vunpack.c.l.b16 %v345
        %v690 = vunpack.c.h.b16 %v345
        %v691 = vunpack.c.l.b16 %v346
        %v692 = vunpack.c.h.b16 %v346
        %v693 = vunpack.c.l.b16 %v347
        %v694 = vunpack.c.h.b16 %v347
        %v695 = vunpack.c.l.b16 %v348
        %v696 = vunpack.c.h.b16 %v348
        %v697 = vunpack.c.l.b16 %v349
        %v698 = vunpack.c.h.b16 %v349
        %v699 = vunpack.c.l.b16 %v350
        %v700 = vunpack.c.h.b16 %v350
        %v701 = vunpack.c.l.b16 %v351
        %v702 = vunpack.c.h.b16 %v351
        %v703 = vunpack.c.l.b16 %v352
        %v704 = vunpack.c.h.b16 %v352
        %v705 = vunpack.c.l.b16 %v353
        %v706 = vunpack.c.h.b16 %v353
        %v707 = vunpack.c.l.b16 %v354
        %v708 = vunpack.c.h.b16 %v354
        %v709 = vunpack.c.l.b16 %v355
        %v710 = vunpack.c.h.b16 %v355
        %v711 = vunpack.c.l.b16 %v356
        %v712 = vunpack.c.h.b16 %v356
        %v713 = vunpack.c.l.b16 %v357
        %v714 = vunpack.c.h.b16 %v357
        %v715 = vunpack.c.l.b16 %v358
        %v716 = vunpack.c.h.b16 %v358
        %v717 = vunpack.c.l.b16 %v359
        %v718 = vunpack.c.h.b16 %v359
        %v719 = vunpack.c.l.b16 %v360
        %v720 = vunpack.c.h.b16 %v360
        %v721 = vunpack.c.l.b16 %v361
        %v722 = vunpack.c.h.b16 %v361
        %v723 = vunpack.c.l.b16 %v362
        %v724 = vunpack.c.h.b16 %v362
        %v725 = vunpack.c.l.b16 %v363
        %v726 = vunpack.c.h.b16 %v363
        %v727 = vunpack.c.l.b16 %v364
        %v728 = vunpack.c.h.b16 %v364
        %v729 = vunpack.c.l.b16 %v365
        %v730 = vunpack.c.h.b16 %v365
        %v731 = vunpack.c.l.b16 %v366
        %v732 = vunpack.c.h.b16 %v366
        %v733 = vunpack.c.l.b16 %v367
        %v734 = vunpack.c.h.b16 %v367
        %v735 = vunpack.c.l.b16 %v368
        %v736 = vunpack.c.h.b16 %v368
        %v737 = vunpack.c.l.b16 %v369
        %v738 = vunpack.c.h.b16 %v369
        %v739 = vunpack.c.l.b16 %v370
        %v740 = vunpack.c.h.b16 %v370
        %v741 = vunpack.c.l.b16 %v371
        %v742 = vunpack.c.h.b16 %v371
        %v743 = vunpack.c.l.b16 %v372
        %v744 = vunpack.c.h.b16 %v372
        %v745 = vunpack.c.l.b16 %v373
        %v746 = vunpack.c.h.b16 %v373
        %v747 = vunpack.c.l.b16 %v374
        %v748 = vunpack.c.h.b16 %v374
        %v749 = vunpack.c.l.b16 %v375
        %v750 = vunpack.c.h.b16 %v375
        %v751 = vunpack.c.l.b16 %v376
        %v752 = vunpack.c.h.b16 %v376
        %v753 = vunpack.c.l.b16 %v377
        %v754 = vunpack.c.h.b16 %v377
        %v755 = vunpack.c.l.b16 %v378
        %v756 = vunpack.c.h.b16 %v378
        %v757 = vunpack.c.l.b16 %v379
        %v758 = vunpack.c.h.b16 %v379
        %v759 = vunpack.c.l.b16 %v380
        %v760 = vunpack.c.h.b16 %v380
        %v761 = vunpack.c.l.b16 %v381
        %v762 = vunpack.c.h.b16 %v381
        %v763 = vunpack.c.l.b16 %v382
        %v764 = vunpack.c.h.b16 %v382
        %v765 = vunpack.c.l.b16 %v383
        %v766 = vunpack.c.h.b16 %v383
        %v767 = vunpack.c.l.b16 %v384
        %v768 = vunpack.c.h.b16 %v384
        %v769 = vunpack.c.l.b16 %v385
        %v770 = vunpack.c.h.b16 %v385
        %v771 = vunpack.c.l.b16 %v386
        %v772 = vunpack.c.h.b16 %v386
        %v773 = vunpack.c.l.b16 %v387
        %v774 = vunpack.c.h.b16 %v387
        %v775 = vunpack.c.l.b16 %v388
        %v776 = vunpack.c.h.b16 %v388
        %v777 = vunpack.c.l.b16 %v389
        %v778 = vunpack.c.h.b16 %v389
        %v779 = vunpack.c.l.b16 %v390
        %v780 = vunpack.c.h.b16 %v390
        %v781 = vunpack.c.l.b16 %v391
        %v782 = vunpack.c.h.b16 %v391
        %v783 = vunpack.c.l.b16 %v392
        %v784 = vunpack.c.h.b16 %v392
        %v785 = vunpack.c.l.b16 %v393
        %v786 = vunpack.c.h.b16 %v393
        %v787 = vunpack.c.l.b16 %v394
        %v788 = vunpack.c.h.b16 %v394
        %v789 = vunpack.c.l.b16 %v395
        %v790 = vunpack.c.h.b16 %v395
        %v791 = vunpack.c.l.b16 %v396
        %v792 = vunpack.c.h.b16 %v396
        %v793 = vunpack.c.l.b16 %v397
        %v794 = vunpack.c.h.b16 %v397
        %v795 = vunpack.c.l.b16 %v398
        %v796 = vunpack.c.h.b16 %v398
        %v797 = vunpack.c.l.b16 %v399
        %v798 = vunpack.c.h.b16 %v399
        %v799 = vunpack.c.l.b16 %v400
        %v800 = vunpack.c.h.b16 %v400
        %v801 = vunpack.c.l.b16 %v401
        %v802 = vunpack.c.h.b16 %v401
        %v803 = vunpack.c.l.b16 %v402
        %v804 = vunpack.c.h.b16 %v402
        %v805 = vunpack.c.l.b16 %v403
        %v806 = vunpack.c.h.b16 %v403
        %v807 = vunpack.c.l.b16 %v404
        %v808 = vunpack.c.h.b16 %v404
        %v809 = vunpack.c.l.b16 %v405
        %v810 = vunpack.c.h.b16 %v405
        %v811 = vunpack.c.l.b16 %v406
        %v812 = vunpack.c.h.b16 %v406
        %v813 = vpack.c.b16 %v561, %v557
        %v814 = vpack.c.b16 %v562, %v558
        %v815 = vpack.c.b16 %v563, %v559
        %v816 = vpack.c.b16 %v564, %v560
        %v817 = vpack.c.b16 %v569, %v565
        %v818 = vpack.c.b16 %v570, %v566
        %v819 = vpack.c.b16 %v571, %v567
        %v820 = vpack.c.b16 %v572, %v568
        %v821 = vpack.c.b16 %v577, %v573
        %v822 = vpack.c.b16 %v578, %v574
        %v823 = vpack.c.b16 %v579, %v575
        %v824 = vpack.c.b16 %v580, %v576
        %v825 = vpack.c.b16 %v585, %v581
        %v826 = vpack.c.b16 %v586, %v582
        %v827 = vpack.c.b16 %v587, %v583
        %v828 = vpack.c.b16 %v588, %v584
        %v829 = vpack.c.b16 %v593, %v589
        %v830 = vpack.c.b16 %v594, %v590
        %v831 = vpack.c.b16 %v595, %v591
        %v832 = vpack.c.b16 %v596, %v592
        %v833 = vpack.c.b16 %v601, %v597
        %v834 = vpack.c.b16 %v602, %v598
        %v835 = vpack.c.b16 %v603, %v599
        %v836 = vpack.c.b16 %v604, %v600
        %v837 = vpack.c.b16 %v609, %v605
        %v838 = vpack.c.b16 %v610, %v606
        %v839 = vpack.c.b16 %v611, %v607
        %v840 = vpack.c.b16 %v612, %v608
        %v841 = vpack.c.b16 %v617, %v613
        %v842 = vpack.c.b16 %v618, %v614
        %v843 = vpack.c.b16 %v619, %v615
        %v844 = vpack.c.b16 %v620, %v616
        %v845 = vpack.c.b16 %v625, %v621
        %v846 = vpack.c.b16 %v626, %v622
        %v847 = vpack.c.b16 %v627, %v623
        %v848 = vpack.c.b16 %v628, %v624
        %v849 = vpack.c.b16 %v633, %v629
        %v850 = vpack.c.b16 %v634, %v630
        %v851 = vpack.c.b16 %v635, %v631
        %v852 = vpack.c.b16 %v636, %v632
        %v853 = vpack.c.b16 %v641, %v637
        %v854 = vpack.c.b16 %v642, %v638
        %v855 = vpack.c.b16 %v643, %v639
        %v856 = vpack.c.b16 %v644, %v640
        %v857 = vpack.c.b16 %v649, %v645
        %v858 = vpack.c.b16 %v650, %v646
        %v859 = vpack.c.b16 %v651, %v647
        %v860 = vpack.c.b16 %v652, %v648
        %v861 = vpack.c.b16 %v657, %v653
        %v862 = vpack.c.b16 %v658, %v654
        %v863 = vpack.c.b16 %v659, %v655
        %v864 = vpack.c.b16 %v660, %v656
        %v865 = vpack.c.b16 %v665, %v661
        %v866 = vpack.c.b16 %v666, %v662
        %v867 = vpack.c.b16 %v667, %v663
        %v868 = vpack.c.b16 %v668, %v664
        %v869 = vpack.c.b16 %v673, %v669
        %v870 = vpack.c.b16 %v674, %v670
        %v871 = vpack.c.b16 %v675, %v671
        %v872 = vpack.c.b16 %v676, %v672
        %v873 = vpack.c.b16 %v681, %v677
        %v874 = vpack.c.b16 %v682, %v678
        %v875 = vpack.c.b16 %v683, %v679
        %v876 = vpack.c.b16 %v684, %v680
        %v877 = vpack.c.b16 %v689, %v685
        %v878 = vpack.c.b16 %v690, %v686
        %v879 = vpack.c.b16 %v691, %v687
        %v880 = vpack.c.b16 %v692, %v688
        %v881 = vpack.c.b16 %v697, %v693
        %v882 = vpack.c.b16 %v698, %v694
        %v883 = vpack.c.b16 %v699, %v695
        %v884 = vpack.c.b16 %v700, %v696
        %v885 = vpack.c.b16 %v705, %v701
        %v886 = vpack.c.b16 %v706, %v702
        %v887 = vpack.c.b16 %v707, %v703
        %v888 = vpack.c.b16 %v708, %v704
        %v889 = vpack.c.b16 %v713, %v709
        %v890 = vpack.c.b16 %v714, %v710
        %v891 = vpack.c.b16 %v715, %v711
        %v892 = vpack.c.b16 %v716, %v712
        %v893 = vpack.c.b16 %v721, %v717
        %v894 = vpack.c.b16 %v722, %v718
        %v895 = vpack.c.b16 %v723, %v719
        %v896 = vpack.c.b16 %v724, %v720
        %v897 = vpack.c.b16 %v729, %v725
        %v898 = vpack.c.b16 %v730, %v726
        %v899 = vpack.c.b16 %v731, %v727
        %v900 = vpack.c.b16 %v732, %v728
        %v901 = vpack.c.b16 %v737, %v733
        %v902 = vpack.c.b16 %v738, %v734
        %v903 = vpack.c.b16 %v739, %v735
        %v904 = vpack.c.b16 %v740, %v736
        %v905 = vpack.c.b16 %v745, %v741
        %v906 = vpack.c.b16 %v746, %v742
        %v907 = vpack.c.b16 %v747, %v743
        %v908 = vpack.c.b16 %v748, %v744
        %v909 = vpack.c.b16 %v753, %v749
        %v910 = vpack.c.b16 %v754, %v750
        %v911 = vpack.c.b16 %v755, %v751
        %v912 = vpack.c.b16 %v756, %v752
        %v913 = vpack.c.b16 %v761, %v757
        %v914 = vpack.c.b16 %v762, %v758
        %v915 = vpack.c.b16 %v763, %v759
        %v916 = vpack.c.b16 %v764, %v760
        %v917 = vpack.c.b16 %v769, %v765
        %v918 = vpack.c.b16 %v770, %v766
        %v919 = vpack.c.b16 %v771, %v767
        %v920 = vpack.c.b16 %v772, %v768
        %v921 = vpack.c.b16 %v777, %v773
        %v922 = vpack.c.b16 %v778, %v774
        %v923 = vpack.c.b16 %v779, %v775
        %v924 = vpack.c.b16 %v780, %v776
        %v925 = vpack.c.b16 %v785, %v781
        %v926 = vpack.c.b16 %v786, %v782
        %v927 = vpack.c.b16 %v787, %v783
        %v928 = vpack.c.b16 %v788, %v784
        %v929 = vpack.c.b16 %v793, %v789
        %v930 = vpack.c.b16 %v794, %v790
        %v931 = vpack.c.b16 %v795, %v791
        %v932 = vpack.c.b16 %v796, %v792
        %v933 = vpack.c.b16 %v801, %v797
        %v934 = vpack.c.b16 %v802, %v798
        %v935 = vpack.c.b16 %v803, %v799
        %v936 = vpack.c.b16 %v804, %v800
        %v937 = vpack.c.b16 %v809, %v805
        %v938 = vpack.c.b16 %v810, %v806
        %v939 = vpack.c.b16 %v811, %v807
        %v940 = vpack.c.b16 %v812, %v808
        %1069 = vmatprep.subr.bf16.mxu0 %v814
        %1070 = vmatpush1.bf16.msra.mxu0 %v813
        %1071 = vmatprep.subr.bf16.mxu0 %v818
        %1072 = vmatpush1.bf16.msra.mxu0 %v817
        %1073 = vmatprep.subr.bf16.mxu0 %v822
        %1074 = vmatpush1.bf16.msra.mxu0 %v821
        %1075 = vmatprep.subr.bf16.mxu0 %v826
        %1076 = vmatpush1.bf16.msra.mxu0 %v825
        %1077 = vmatprep.subr.bf16.mxu0 %v830
        %1078 = vmatpush1.bf16.msra.mxu0 %v829
        %1079 = vmatprep.subr.bf16.mxu0 %v834
        %1080 = vmatpush1.bf16.msra.mxu0 %v833
        %1081 = vmatprep.subr.bf16.mxu0 %v838
        %1082 = vmatpush1.bf16.msra.mxu0 %v837
        %1083 = vmatprep.subr.bf16.mxu0 %v842
        %1084 = vmatpush1.bf16.msra.mxu0 %v841
        %1085 = vmatprep.subr.bf16.mxu0 %v846
        %1086 = vmatpush1.bf16.msra.mxu0 %v845
        %1087 = vmatprep.subr.bf16.mxu0 %v850
        %1088 = vmatpush1.bf16.msra.mxu0 %v849
        %1089 = vmatprep.subr.bf16.mxu0 %v854
        %1090 = vmatpush1.bf16.msra.mxu0 %v853
        %1091 = vmatprep.subr.bf16.mxu0 %v858
        %1092 = vmatpush1.bf16.msra.mxu0 %v857
        %1093 = vmatprep.subr.bf16.mxu0 %v862
        %1094 = vmatpush1.bf16.msra.mxu0 %v861
        %1095 = vmatprep.subr.bf16.mxu0 %v866
        %1096 = vmatpush1.bf16.msra.mxu0 %v865
        %1097 = vmatprep.subr.bf16.mxu0 %v870
        %1098 = vmatpush1.bf16.msra.mxu0 %v869
        %1099 = vmatprep.subr.bf16.mxu0 %v874
        %1100 = vmatpush1.bf16.msra.mxu0 %v873
        %1101 = vmatprep.mubr.bf16.mxu0 %v276
        %1102 = vmatmul.mubr.bf16.gmra.mrb[0].mxu0 %v275
        %v1103 = vpop.f32.mrb[0].mxu0
        %v1104 = vadd.f32 %v412, %v1103
        %v1105 = vpop.f32.mrb[0].mxu0
        %v1106 = vadd.f32 %v416, %v1105
        %v1107 = vpop.f32.mrb[0].mxu0
        %v1108 = vadd.f32 %v412, %v1107
        %v1109 = vpop.f32.mrb[0].mxu0
        %v1110 = vadd.f32 %v416, %v1109
        %1111 = vdwg.mxu0
        %1112 = vmatprep.subr.bf16.mxu0 %v878
        %1113 = vmatpush1.bf16.msra.mxu0 %v877
        %1114 = vmatprep.subr.bf16.mxu0 %v882
        %1115 = vmatpush1.bf16.msra.mxu0 %v881
        %1116 = vmatprep.subr.bf16.mxu0 %v886
        %1117 = vmatpush1.bf16.msra.mxu0 %v885
        %1118 = vmatprep.subr.bf16.mxu0 %v890
        %1119 = vmatpush1.bf16.msra.mxu0 %v889
        %1120 = vmatprep.subr.bf16.mxu0 %v894
        %1121 = vmatpush1.bf16.msra.mxu0 %v893
        %1122 = vmatprep.subr.bf16.mxu0 %v898
        %1123 = vmatpush1.bf16.msra.mxu0 %v897
        %1124 = vmatprep.subr.bf16.mxu0 %v902
        %1125 = vmatpush1.bf16.msra.mxu0 %v901
        %1126 = vmatprep.subr.bf16.mxu0 %v906
        %1127 = vmatpush1.bf16.msra.mxu0 %v905
        %1128 = vmatprep.subr.bf16.mxu0 %v910
        %1129 = vmatpush1.bf16.msra.mxu0 %v909
        %1130 = vmatprep.subr.bf16.mxu0 %v914
        %1131 = vmatpush1.bf16.msra.mxu0 %v913
        %1132 = vmatprep.subr.bf16.mxu0 %v918
        %1133 = vmatpush1.bf16.msra.mxu0 %v917
        %1134 = vmatprep.subr.bf16.mxu0 %v922
        %1135 = vmatpush1.bf16.msra.mxu0 %v921
        %1136 = vmatprep.subr.bf16.mxu0 %v926
        %1137 = vmatpush1.bf16.msra.mxu0 %v925
        %1138 = vmatprep.subr.bf16.mxu0 %v930
        %1139 = vmatpush1.bf16.msra.mxu0 %v929
        %1140 = vmatprep.subr.bf16.mxu0 %v934
        %1141 = vmatpush1.bf16.msra.mxu0 %v933
        %1142 = vmatprep.subr.bf16.mxu0 %v938
        %1143 = vmatpush1.bf16.msra.mxu0 %v937
        %1144 = vmatprep.mubr.bf16.mxu0 %v278
        %1145 = vmatmul.mubr.bf16.gmra.mrb[0].mxu0 %v277
        %v1146 = vpop.f32.mrb[0].mxu0
        %v1147 = vadd.f32 %v1104, %v1146
        %v1148 = vpop.f32.mrb[0].mxu0
        %v1149 = vadd.f32 %v1106, %v1148
        %v1150 = vpop.f32.mrb[0].mxu0
        %v1151 = vadd.f32 %v1108, %v1150
        %v1152 = vpop.f32.mrb[0].mxu0
        %v1153 = vadd.f32 %v1110, %v1152
        %1154 = vdwg.mxu0
        %1155 = vmatprep.subr.bf16.mxu0 %v816
        %1156 = vmatpush1.bf16.msra.mxu0 %v815
        %1157 = vmatprep.subr.bf16.mxu0 %v820
        %1158 = vmatpush1.bf16.msra.mxu0 %v819
        %1159 = vmatprep.subr.bf16.mxu0 %v824
        %1160 = vmatpush1.bf16.msra.mxu0 %v823
        %1161 = vmatprep.subr.bf16.mxu0 %v828
        %1162 = vmatpush1.bf16.msra.mxu0 %v827
        %1163 = vmatprep.subr.bf16.mxu0 %v832
        %1164 = vmatpush1.bf16.msra.mxu0 %v831
        %1165 = vmatprep.subr.bf16.mxu0 %v836
        %1166 = vmatpush1.bf16.msra.mxu0 %v835
        %1167 = vmatprep.subr.bf16.mxu0 %v840
        %1168 = vmatpush1.bf16.msra.mxu0 %v839
        %1169 = vmatprep.subr.bf16.mxu0 %v844
        %1170 = vmatpush1.bf16.msra.mxu0 %v843
        %1171 = vmatprep.subr.bf16.mxu0 %v848
        %1172 = vmatpush1.bf16.msra.mxu0 %v847
        %1173 = vmatprep.subr.bf16.mxu0 %v852
        %1174 = vmatpush1.bf16.msra.mxu0 %v851
        %1175 = vmatprep.subr.bf16.mxu0 %v856
        %1176 = vmatpush1.bf16.msra.mxu0 %v855
        %1177 = vmatprep.subr.bf16.mxu0 %v860
        %1178 = vmatpush1.bf16.msra.mxu0 %v859
        %1179 = vmatprep.subr.bf16.mxu0 %v864
        %1180 = vmatpush1.bf16.msra.mxu0 %v863
        %1181 = vmatprep.subr.bf16.mxu0 %v868
        %1182 = vmatpush1.bf16.msra.mxu0 %v867
        %1183 = vmatprep.subr.bf16.mxu0 %v872
        %1184 = vmatpush1.bf16.msra.mxu0 %v871
        %1185 = vmatprep.subr.bf16.mxu0 %v876
        %1186 = vmatpush1.bf16.msra.mxu0 %v875
        %1187 = vmatprep.mubr.bf16.mxu0 %v276
        %1188 = vmatmul.mubr.bf16.gmra.mrb[0].mxu0 %v275
        %v1189 = vpop.f32.mrb[0].mxu0
        %v1190 = vadd.f32 %v420, %v1189
        %v1191 = vpop.f32.mrb[0].mxu0
        %v1192 = vadd.f32 %v424, %v1191
        %v1193 = vpop.f32.mrb[0].mxu0
        %v1194 = vadd.f32 %v420, %v1193
        %v1195 = vpop.f32.mrb[0].mxu0
        %v1196 = vadd.f32 %v424, %v1195
        %1197 = vdwg.mxu0
        %1198 = vmatprep.subr.bf16.mxu0 %v880
        %1199 = vmatpush1.bf16.msra.mxu0 %v879
        %1200 = vmatprep.subr.bf16.mxu0 %v884
        %1201 = vmatpush1.bf16.msra.mxu0 %v883
        %1202 = vmatprep.subr.bf16.mxu0 %v888
        %1203 = vmatpush1.bf16.msra.mxu0 %v887
        %1204 = vmatprep.subr.bf16.mxu0 %v892
        %1205 = vmatpush1.bf16.msra.mxu0 %v891
        %1206 = vmatprep.subr.bf16.mxu0 %v896
        %1207 = vmatpush1.bf16.msra.mxu0 %v895
        %1208 = vmatprep.subr.bf16.mxu0 %v900
        %1209 = vmatpush1.bf16.msra.mxu0 %v899
        %1210 = vmatprep.subr.bf16.mxu0 %v904
        %1211 = vmatpush1.bf16.msra.mxu0 %v903
        %1212 = vmatprep.subr.bf16.mxu0 %v908
        %1213 = vmatpush1.bf16.msra.mxu0 %v907
        %1214 = vmatprep.subr.bf16.mxu0 %v912
        %1215 = vmatpush1.bf16.msra.mxu0 %v911
        %1216 = vmatprep.subr.bf16.mxu0 %v916
        %1217 = vmatpush1.bf16.msra.mxu0 %v915
        %1218 = vmatprep.subr.bf16.mxu0 %v920
        %1219 = vmatpush1.bf16.msra.mxu0 %v919
        %1220 = vmatprep.subr.bf16.mxu0 %v924
        %1221 = vmatpush1.bf16.msra.mxu0 %v923
        %1222 = vmatprep.subr.bf16.mxu0 %v928
        %1223 = vmatpush1.bf16.msra.mxu0 %v927
        %1224 = vmatprep.subr.bf16.mxu0 %v932
        %1225 = vmatpush1.bf16.msra.mxu0 %v931
        %1226 = vmatprep.subr.bf16.mxu0 %v936
        %1227 = vmatpush1.bf16.msra.mxu0 %v935
        %1228 = vmatprep.subr.bf16.mxu0 %v940
        %1229 = vmatpush1.bf16.msra.mxu0 %v939
        %1230 = vmatprep.mubr.bf16.mxu0 %v278
        %1231 = vmatmul.mubr.bf16.gmra.mrb[0].mxu0 %v277
        %v1232 = vpop.f32.mrb[0].mxu0
        %v1233 = vadd.f32 %v1190, %v1232
        %v1234 = vpop.f32.mrb[0].mxu0
        %v1235 = vadd.f32 %v1192, %v1234
        %v1236 = vpop.f32.mrb[0].mxu0
        %v1237 = vadd.f32 %v1194, %v1236
        %v1238 = vpop.f32.mrb[0].mxu0
        %v1239 = vadd.f32 %v1196, %v1238
        %1240 = vdwg.mxu0
        %1241 = vst [vmem:[%s261] sm:$0xff] %v1147
        %1242 = vst [vmem:[%s261 + $0x8] sm:$0xff] %v1149
        %1243 = vst [vmem:[%s261 + $0x10] sm:$0xff] %v1233
        %1244 = vst [vmem:[%s261 + $0x18] sm:$0xff] %v1235
        %1245 = vst [vmem:[%s261 + $0x20] sm:$0xff] %v1151
        %1246 = vst [vmem:[%s261 + $0x28] sm:$0xff] %v1153
        %1247 = vst [vmem:[%s261 + $0x30] sm:$0xff] %v1237
        %1248 = vst [vmem:[%s261 + $0x38] sm:$0xff] %v1239
        %s1249 = sand.u32 %s121, 1
        %s1250 = scalar_lea.sflag [#allocation4], %s1249
        %s1251 = sand.u32 %s121, 1
        %s1252 = smul.addr %s1251, 64
        %s1253 = scalar_lea.vmem [#allocation8], %s1252
        // Predicated region
        $region45: #{tpu_custom_call.1} parent=31 // pred_check
          %p1254 = pneg %p131
        $region46: #{tpu_custom_call.1} parent=31 // pred_check_branch
          %1256 = sbr.rel (%p1254) target = $region48
        $region47: #{tpu_custom_call.1} parent=31 // pred_region
          %s1257 = smul.u32 2, %s25
          %s1258 = smul.u32 4, %s26
          %s1260 = ssub.s32 1024, 1024
          %1261 = vsyncadd %s1250, %s1260
          %s1262 = smul.addr %s1257, 12
          %s1263 = sadd.s32 %s1258, %s1262
          %s1264 = smul.addr %s1263, 128
          %s1265 = scalar_lea.hbm %s3, %s1264
          %s1266 = sshll.u32 %s1253, 4
          %s1267 = int_to_ptr.vmem [resolvable:$true] %s1266
          %1272 = dma.vmem_to_hbm [thread:$0]  %s1267, 1024, %s1265, %s1250, 512, 1536, 32
        $region48: #{tpu_custom_call.1} parent=31 // pred_fallthru
          _
      $region32: #{tpu_custom_call.1} parent=5 // pred_fallthru
        _
      %p1273 = scmp.le.s32.totalorder 2, %s16
      // Predicated region
      $region49: #{tpu_custom_call.1} parent=5 // pred_check
        %p1274 = pneg %p1273
      $region50: #{tpu_custom_call.1} parent=5 // pred_check_branch
        %1276 = sbr.rel (%p1274) target = $region52
      $region51: #{tpu_custom_call.1} parent=5 // pred_region
        %s1277 = ssub.s32 %s16, 2
        // Predicated region
        $region53: #{tpu_custom_call.1} parent=51 // pred_check
          %p1278 = pneg %p137
        $region54: #{tpu_custom_call.1} parent=51 // pred_check_branch
          %1280 = sbr.rel (%p1278) target = $region56
        $region55: #{tpu_custom_call.1} parent=51 // pred_region
          %s1281 = sand.u32 %s122, 1
          %s1282 = scalar_lea.sflag [#allocation4], %s1281
          %s1283 = sand.u32 %s122, 1
          %s1284 = smul.addr %s1283, 64
          %s1285 = scalar_lea.vmem [#allocation8], %s1284
          %1286 = dma.done %s1282, 1024
        $region56: #{tpu_custom_call.1} parent=51 // pred_fallthru
          _
      $region52: #{tpu_custom_call.1} parent=5 // pred_fallthru
        _
    $region6: #{tpu_custom_call.1} parent=1 // loop_footer
      %s20 = sadd.s32 1, %s16
    $region7: #{tpu_custom_call.1} parent=1 // loop_footer_branch
      %15 = sbr.rel target = $region3
    $region8: #{tpu_custom_call.1} parent=1 // loop_exit
      _
    %1287 = vsyncpa [#allocation3], 1
    %s1288 = scalar_lea.sflag [#allocation3], 1
    %1289 = vsyncpa %s1288, 1
    %1290 = vsyncpa [#allocation6], 1
    %s1291 = scalar_lea.sflag [#allocation6], 1
    %1292 = vsyncpa %s1291, 1
    %1293 = vsyncpa [#allocation4], 1
    %s1294 = scalar_lea.sflag [#allocation4], 1
    %1295 = vsyncpa %s1294, 1

</llo_original>
